<compile_context>
chip_gen: v7x
topology: tpu7x:2x2x1
jax: 0.10.0
libtpu: 0.0.40
codegen_flags: <defaults>
</compile_context>

<pallas_src>
import jax
import jax.numpy as jnp
from jax import lax
from jax.experimental import pallas as pl
from jax.experimental.pallas import tpu as pltpu


def net_kernel(x_ref, w0_ref, b0_ref, w1pT_ref, b1pT_ref, o_ref):
    """One batch tile: binarize -> fc0 -> fused (fc1 + cat), lane-dense (2,TB) out."""
    xv = x_ref[...]                                    # (TB, 256), DMA dtype (bf16/f32)
    feed = w0_ref.dtype                                # MXU feed dtype
    # binarize: (sign(x-0.5)+1)/2 == {x>0.5: 1, x<0.5: 0, x==0.5: 0.5};
    # {0, 0.5, 1} are exact in bf16 and f32, so the cast to `feed` is exact.
    xb = jnp.where(xv > 0.5, jnp.asarray(1.0, feed),
                   jnp.where(xv < 0.5, jnp.asarray(0.0, feed),
                             jnp.asarray(0.5, feed)))

    # fc0: Linear(256, 32), f32 accumulation on the MXU.
    h = jnp.dot(xb, w0_ref[...], preferred_element_type=jnp.float32) + b0_ref[...]

    # fc1 + cat((y, 1-y)) fused into a (2, 32) matmul, emitted transposed:
    # yT[o, b] = sum_k w1pT[o, k] * h[b, k]  ->  (2, TB) lane-dense output block
    # (unmasked stores, ~16x less padded output VMEM than a (TB, 2) block).
    yT = lax.dot_general(w1pT_ref[...].astype(jnp.float32), h,
                         dimension_numbers=(((1,), (1,)), ((), ())),
                         preferred_element_type=jnp.float32)
    o_ref[...] = (yT + b1pT_ref[...]).astype(o_ref.dtype)


def _pick_batch_tile(B, tb):
    """Batch-tile size. Multiples of 128 when tiling keep both the (TB, 256)
    input block and the lane-dense (2, TB) output block (8,128)-legal."""
    if tb >= B:
        if B >= 2048:
            # Split even a single-block batch in two so the "parallel" grid axis
            # gives both v7x TensorCores work.
            return ((B + 1) // 2 + 127) // 128 * 128
        return B                            # block dims == array dims: always legal
    return max(128, (tb // 128) * 128)


def net_forward(x_img, w0_t, b0, w1_t, b1, *, tb=4096, x_dtype=jnp.bfloat16,
                param_dtype=jnp.float32, vmem_limit_bytes=None):
    """x_img: (B, 1, H, W) float32. Returns (B, 2) float32.

    w0_t: (256, 32)  transposed torch weight of fc0
    b0:   (1, 32)
    w1_t: (32, 1)    transposed torch weight of fc1
    b1:   (1, 1)
    tb:          batch tile (pipelined over the batch grid axis); tune per gen.
    x_dtype:     x DMA dtype. bf16 default (2x less input bandwidth); pass
                 jnp.float32 for bit-exact thresholding vs. the torch reference.
                 Best case: the producer already hands x over in this dtype.
    param_dtype: MXU feed dtype for weights/activations (f32 default, bf16 opt).
    vmem_limit_bytes: raise the scoped-VMEM limit for very large tb (e.g. v6e
                 tb=8192 with f32 x wants ~48 MiB).
    """
    B = x_img.shape[0]
    in_size = 1
    for d in x_img.shape[1:]:
        in_size *= d
    x = x_img.reshape(B, in_size)                      # == torch x.view(-1, in_size)
    if x_dtype is not None and x.dtype != x_dtype:
        x = x.astype(x_dtype)

    H1 = w0_t.shape[1]
    w0 = w0_t.astype(param_dtype)
    b0f = b0.astype(jnp.float32)
    # Fuse fc1 and cat((y, 1 - y), -1):  [y, 1-y] = h @ [w1, -w1] + [b1, 1-b1].
    # Stored transposed ((2, H1) / (2, 1)) so the kernel emits a (2, TB) block.
    w1pT = jnp.concatenate([w1_t.T, -w1_t.T], axis=0).astype(param_dtype)   # (2, H1)
    b1pT = jnp.concatenate([b1, 1.0 - b1], axis=1).T.astype(jnp.float32)    # (2, 1)

    TB = _pick_batch_tile(B, tb)
    grid = (pl.cdiv(B, TB),)

    grid_spec = pltpu.PrefetchScalarGridSpec(
        num_scalar_prefetch=0,
        grid=grid,
        in_specs=[
            pl.BlockSpec((TB, in_size), lambda i: (i, 0)),   # x: streamed per tile
            pl.BlockSpec((in_size, H1), lambda i: (0, 0)),   # w0: resident
            pl.BlockSpec((1, H1), lambda i: (0, 0)),         # b0: resident
            pl.BlockSpec((2, H1), lambda i: (0, 0)),         # w1' (transposed, fused cat)
            pl.BlockSpec((2, 1), lambda i: (0, 0)),          # b1' (transposed, fused cat)
        ],
        out_specs=pl.BlockSpec((2, TB), lambda i: (0, i)),   # lane-dense transposed out
    )

    out_t = pl.pallas_call(
        net_kernel,
        out_shape=jax.ShapeDtypeStruct((2, B), jnp.float32),
        grid_spec=grid_spec,
        compiler_params=pltpu.CompilerParams(
            dimension_semantics=("parallel",),               # shard batch tiles across TCs
            vmem_limit_bytes=vmem_limit_bytes),
    )(x, w0, b0f, w1pT, b1pT)
    return out_t.T                                           # (B, 2), matches torch cat


def init_params(key, in_size=256, h1=32, h2=1):
    """Deterministic nn.Linear-style init: U(-1/sqrt(fan_in), 1/sqrt(fan_in))."""
    k0w, k0b, k1w, k1b = jax.random.split(key, 4)
    bound0 = 1.0 / jnp.sqrt(in_size)
    bound1 = 1.0 / jnp.sqrt(h1)
    # torch weights are (out, in); store transposed (in, out) for the kernel.
    w0_t = jax.random.uniform(k0w, (in_size, h1), jnp.float32, -bound0, bound0)
    b0 = jax.random.uniform(k0b, (1, h1), jnp.float32, -bound0, bound0)
    w1_t = jax.random.uniform(k1w, (h1, h2), jnp.float32, -bound1, bound1)
    b1 = jax.random.uniform(k1b, (1, h2), jnp.float32, -bound1, bound1)
    return w0_t, b0, w1_t, b1


def reference_forward(x_img, w0_t, b0, w1_t, b1, x_dtype=None):
    B = x_img.shape[0]
    x = x_img.reshape(B, -1)
    if x_dtype is not None:
        x = x.astype(x_dtype).astype(jnp.float32)   # same values the kernel DMA sees
    xb = (jnp.sign(x - 0.5) + 1.0) * 0.5
    h = xb @ w0_t + b0
    y = h @ w1_t + b1
    return jnp.concatenate([y, 1.0 - y], axis=-1)


if __name__ == "__main__":
    key = jax.random.PRNGKey(0)
    kx, kp, kx2 = jax.random.split(key, 3)

    # img_size = 16 -> in_size = 256 (single-channel image, as the module implies)
    B, C, H, W = 2, 1, 16, 16
    x_img = jax.random.uniform(kx, (B, C, H, W), jnp.float32)
    w0_t, b0, w1_t, b1 = init_params(kp, in_size=H * W, h1=32, h2=1)

    # 1) Bit-exact path (f32 x DMA), single block.
    out = jax.block_until_ready(
        net_forward(x_img, w0_t, b0, w1_t, b1, x_dtype=jnp.float32))
    ref = reference_forward(x_img, w0_t, b0, w1_t, b1)
    assert out.shape == (B, 2), out.shape
    assert jnp.allclose(out, ref, atol=1e-5, rtol=1e-5), (out, ref)

    # 2) Performance-default path (bf16 x DMA), multi-step grid with a partial
    #    last block (B % TB != 0) to exercise padded-row clipping.
    B2 = 300
    x_img2 = jax.random.uniform(kx2, (B2, C, H, W), jnp.float32)
    out2 = jax.block_until_ready(net_forward(x_img2, w0_t, b0, w1_t, b1, tb=128))
    ref2 = reference_forward(x_img2, w0_t, b0, w1_t, b1, x_dtype=jnp.bfloat16)
    assert out2.shape == (B2, 2), out2.shape
    assert jnp.allclose(out2, ref2, atol=1e-5, rtol=1e-5), (out2, ref2)

    print("KERNEL_OK")
</pallas_src>

<mosaic_0001>
module attributes {stable_mosaic.version = 11 : i64} {
  func.func @net_kernel(%arg0: i32, %arg1: memref<2x256xf32, #tpu.memory_space<vmem>>, %arg2: memref<256x32xf32, #tpu.memory_space<vmem>>, %arg3: memref<1x32xf32, #tpu.memory_space<vmem>>, %arg4: memref<2x32xf32, #tpu.memory_space<vmem>>, %arg5: memref<2x1xf32, #tpu.memory_space<vmem>>, %arg6: memref<2x2xf32, #tpu.memory_space<vmem>>) attributes {dimension_semantics = [#tpu.dimension_semantics<parallel>], iteration_bounds = array<i64: 1>, scalar_prefetch = 0 : i64, scratch_operands = 0 : i64, tpu.core_type = #tpu.core_type<tc>, window_params = [{transform_indices = @transform_0, window_bounds = array<i64: 2, 256>}, {pipeline_mode = #tpu.pipeline_mode<synchronous>, transform_indices = @transform_1, window_bounds = array<i64: 256, 32>}, {pipeline_mode = #tpu.pipeline_mode<synchronous>, transform_indices = @transform_2, window_bounds = array<i64: 1, 32>}, {pipeline_mode = #tpu.pipeline_mode<synchronous>, transform_indices = @transform_3, window_bounds = array<i64: 2, 32>}, {pipeline_mode = #tpu.pipeline_mode<synchronous>, transform_indices = @transform_4, window_bounds = array<i64: 2, 1>}, {transform_indices = @transform_5, window_bounds = array<i64: 2, 2>}]} {
    %c0 = arith.constant 0 : index
    %c0_0 = arith.constant 0 : index
    %0 = vector.load %arg1[%c0, %c0_0] : memref<2x256xf32, #tpu.memory_space<vmem>>, vector<2x256xf32>
    %cst = arith.constant 5.000000e-01 : f32
    %1 = vector.broadcast %cst : f32 to vector<2x256xf32>
    %2 = arith.cmpf ogt, %0, %1 : vector<2x256xf32>
    %cst_1 = arith.constant 5.000000e-01 : f32
    %3 = vector.broadcast %cst_1 : f32 to vector<2x256xf32>
    %4 = arith.cmpf olt, %0, %3 : vector<2x256xf32>
    %cst_2 = arith.constant 0.000000e+00 : f32
    %cst_3 = arith.constant 5.000000e-01 : f32
    %5 = vector.broadcast %cst_2 : f32 to vector<2x256xf32>
    %6 = vector.broadcast %cst_3 : f32 to vector<2x256xf32>
    %7 = arith.select %4, %5, %6 : vector<2x256xi1>, vector<2x256xf32>
    %cst_4 = arith.constant 1.000000e+00 : f32
    %8 = vector.broadcast %cst_4 : f32 to vector<2x256xf32>
    %9 = arith.select %2, %8, %7 : vector<2x256xi1>, vector<2x256xf32>
    %c0_5 = arith.constant 0 : index
    %c0_6 = arith.constant 0 : index
    %10 = vector.load %arg2[%c0_5, %c0_6] : memref<256x32xf32, #tpu.memory_space<vmem>>, vector<256x32xf32>
    %cst_7 = arith.constant dense<0.000000e+00> : vector<2x32xf32>
    %11 = tpu.matmul %9, %10, %cst_7 {dimension_numbers = #tpu.dot_dimension_numbers<[1], [0], [0], [1], [0, 0, 1, 1], [], []>} : vector<2x256xf32>, vector<256x32xf32>, vector<2x32xf32> -> vector<2x32xf32>
    %c0_8 = arith.constant 0 : index
    %c0_9 = arith.constant 0 : index
    %12 = vector.load %arg3[%c0_8, %c0_9] : memref<1x32xf32, #tpu.memory_space<vmem>>, vector<1x32xf32>
    %13 = vector.broadcast %12 : vector<1x32xf32> to vector<2x32xf32>
    %14 = arith.addf %11, %13 : vector<2x32xf32>
    %c0_10 = arith.constant 0 : index
    %c0_11 = arith.constant 0 : index
    %15 = vector.load %arg4[%c0_10, %c0_11] : memref<2x32xf32, #tpu.memory_space<vmem>>, vector<2x32xf32>
    %cst_12 = arith.constant dense<0.000000e+00> : vector<2x2xf32>
    %16 = tpu.matmul %15, %14, %cst_12 {dimension_numbers = #tpu.dot_dimension_numbers<[1], [1], [0], [0], [0, 0, 1, 0], [], []>} : vector<2x32xf32>, vector<2x32xf32>, vector<2x2xf32> -> vector<2x2xf32>
    %c0_13 = arith.constant 0 : index
    %c0_14 = arith.constant 0 : index
    %17 = vector.load %arg5[%c0_13, %c0_14] : memref<2x1xf32, #tpu.memory_space<vmem>>, vector<2x1xf32>
    %18 = vector.broadcast %17 : vector<2x1xf32> to vector<2x2xf32>
    %19 = arith.addf %16, %18 : vector<2x2xf32>
    %c0_15 = arith.constant 0 : index
    %c0_16 = arith.constant 0 : index
    %20 = vector.load %arg6[%c0_15, %c0_16] : memref<2x2xf32, #tpu.memory_space<vmem>>, vector<2x2xf32>
    tpu.vector_store %arg6[%c0_15, %c0_16], %19 {strides = array<i32>} : memref<2x2xf32, #tpu.memory_space<vmem>>, vector<2x2xf32>,
    return
  }
  func.func @transform_0(%arg0: i32) -> (i32, i32) {
    %c0_i32 = arith.constant 0 : i32
    %c0_i32_0 = arith.constant 0 : i32
    return %arg0, %c0_i32 : i32, i32
  }
  func.func @transform_1(%arg0: i32) -> (i32, i32) {
    %c0_i32 = arith.constant 0 : i32
    %c0_i32_0 = arith.constant 0 : i32
    %c0_i32_1 = arith.constant 0 : i32
    return %c0_i32, %c0_i32_0 : i32, i32
  }
  func.func @transform_2(%arg0: i32) -> (i32, i32) {
    %c0_i32 = arith.constant 0 : i32
    %c0_i32_0 = arith.constant 0 : i32
    %c0_i32_1 = arith.constant 0 : i32
    return %c0_i32, %c0_i32_0 : i32, i32
  }
  func.func @transform_3(%arg0: i32) -> (i32, i32) {
    %c0_i32 = arith.constant 0 : i32
    %c0_i32_0 = arith.constant 0 : i32
    %c0_i32_1 = arith.constant 0 : i32
    return %c0_i32, %c0_i32_0 : i32, i32
  }
  func.func @transform_4(%arg0: i32) -> (i32, i32) {
    %c0_i32 = arith.constant 0 : i32
    %c0_i32_0 = arith.constant 0 : i32
    %c0_i32_1 = arith.constant 0 : i32
    return %c0_i32, %c0_i32_0 : i32, i32
  }
  func.func @transform_5(%arg0: i32) -> (i32, i32) {
    %c0_i32 = arith.constant 0 : i32
    %c0_i32_0 = arith.constant 0 : i32
    return %c0_i32, %arg0 : i32, i32
  }
}

</mosaic_0001>

<llo_original>
// kernel: tpu_custom_call.1
$region0: #{tpu_custom_call.1}
  #allocation0 [shape = 'u32[]', space=smem, size = 0x4, offset = 0x4, fixed_abs, tag = 'smem constant byte address 0x4 - core index']
  #allocation1 [shape = 'u32[144,128]{1,0:T(1,128)}', space=vmem, size = 0x12000, scoped, tag = 'internal scratch']
  %s0 = inlined_call_operand.vmem [shape: f32[2,256], index: 0, kind: input, shape index: {}]
  %s1 = inlined_call_operand.vmem [shape: f32[256,32], index: 1, kind: input, shape index: {}]
  %s2 = inlined_call_operand.vmem [shape: f32[1,32], index: 2, kind: input, shape index: {}]
  %s3 = inlined_call_operand.vmem [shape: f32[2,32], index: 3, kind: input, shape index: {}]
  %s4 = inlined_call_operand.vmem [shape: f32[2,1], index: 4, kind: input, shape index: {}]
  %s5 = inlined_call_operand.hbm [shape: f32[2,2], index: 5, kind: output, shape index: {}]
  %s6 = sld [smem:[#allocation0]]
  $region30: #{tpu_custom_call.1} parent=0
    _
  %s8 = ssub.s32 1, %s6
  %s9 = scalar_select 0, %s8, %s6
  $region1: #{tpu_custom_call.1} parent=0
    #allocation2 [shape = 'u8[1024]{0}', space=vmem, size = 0x400, scoped, tag = 'output window, operand 0, single buffered']
    #allocation3 [shape = 's32[1]{0}', space=sflag, size = 0x4, scoped, tag = 'scoped memory for tpu_custom_call.1']
    %10 = vsyncpa [#allocation3], 0
    // Predicated region
    $region2: #{tpu_custom_call.1} parent=1 // pred_check
      _
    $region3: #{tpu_custom_call.1} parent=1 // pred_check_branch
      %12 = sbr.rel (0) target = $region5
    $region4: #{tpu_custom_call.1} parent=1 // pred_region
      _
    $region5: #{tpu_custom_call.1} parent=1 // pred_fallthru
      _
    // Predicated region
    $region6: #{tpu_custom_call.1} parent=1 // pred_check
      _
    $region7: #{tpu_custom_call.1} parent=1 // pred_check_branch
      %14 = sbr.rel (0) target = $region9
    $region8: #{tpu_custom_call.1} parent=1 // pred_region
      _
    $region9: #{tpu_custom_call.1} parent=1 // pred_fallthru
      _
    // Predicated region
    $region10: #{tpu_custom_call.1} parent=1 // pred_check
      _
    $region11: #{tpu_custom_call.1} parent=1 // pred_check_branch
      %16 = sbr.rel (0) target = $region13
    $region12: #{tpu_custom_call.1} parent=1 // pred_region
      _
    $region13: #{tpu_custom_call.1} parent=1 // pred_fallthru
      _
    // Predicated region
    $region14: #{tpu_custom_call.1} parent=1 // pred_check
      _
    $region15: #{tpu_custom_call.1} parent=1 // pred_check_branch
      %18 = sbr.rel (0) target = $region17
    $region16: #{tpu_custom_call.1} parent=1 // pred_region
      _
    $region17: #{tpu_custom_call.1} parent=1 // pred_fallthru
      _
    // Predicated region
    $region18: #{tpu_custom_call.1} parent=1 // pred_check
      _
    $region19: #{tpu_custom_call.1} parent=1 // pred_check_branch
      %20 = sbr.rel (0) target = $region21
    $region20: #{tpu_custom_call.1} parent=1 // pred_region
      _
    $region21: #{tpu_custom_call.1} parent=1 // pred_fallthru
      _
    %v21 = vld [vmem:[%s0] sm:$0xf]
    %vm22 = vcmp.gt.f32.partialorder %v21, 0.5
    %vm23 = vcmp.lt.f32.partialorder %v21, 0.5
    %v24 = vsel %vm23, 0.0, 0.5
    %v25 = vsel %vm22, 1.0, %v24
    %v26 = vld [vmem:[%s1] sm:$0xff]
    %v27 = vld [vmem:[%s1 + $0x8] sm:$0xff]
    %v28 = vld [vmem:[%s1 + $0x10] sm:$0xff]
    %v29 = vld [vmem:[%s1 + $0x18] sm:$0xff]
    %v30 = vld [vmem:[%s1 + $0x20] sm:$0xff]
    %v31 = vld [vmem:[%s1 + $0x28] sm:$0xff]
    %v32 = vld [vmem:[%s1 + $0x30] sm:$0xff]
    %v33 = vld [vmem:[%s1 + $0x38] sm:$0xff]
    %v34 = vld [vmem:[%s1 + $0x40] sm:$0xff]
    %v35 = vld [vmem:[%s1 + $0x48] sm:$0xff]
    %v36 = vld [vmem:[%s1 + $0x50] sm:$0xff]
    %v37 = vld [vmem:[%s1 + $0x58] sm:$0xff]
    %v38 = vld [vmem:[%s1 + $0x60] sm:$0xff]
    %v39 = vld [vmem:[%s1 + $0x68] sm:$0xff]
    %v40 = vld [vmem:[%s1 + $0x70] sm:$0xff]
    %v41 = vld [vmem:[%s1 + $0x78] sm:$0xff]
    %v42 = vld [vmem:[%s1 + $0x80] sm:$0xff]
    %v43 = vld [vmem:[%s1 + $0x88] sm:$0xff]
    %v44 = vld [vmem:[%s1 + $0x90] sm:$0xff]
    %v45 = vld [vmem:[%s1 + $0x98] sm:$0xff]
    %v46 = vld [vmem:[%s1 + $0xa0] sm:$0xff]
    %v47 = vld [vmem:[%s1 + $0xa8] sm:$0xff]
    %v48 = vld [vmem:[%s1 + $0xb0] sm:$0xff]
    %v49 = vld [vmem:[%s1 + $0xb8] sm:$0xff]
    %v50 = vld [vmem:[%s1 + $0xc0] sm:$0xff]
    %v51 = vld [vmem:[%s1 + $0xc8] sm:$0xff]
    %v52 = vld [vmem:[%s1 + $0xd0] sm:$0xff]
    %v53 = vld [vmem:[%s1 + $0xd8] sm:$0xff]
    %v54 = vld [vmem:[%s1 + $0xe0] sm:$0xff]
    %v55 = vld [vmem:[%s1 + $0xe8] sm:$0xff]
    %v56 = vld [vmem:[%s1 + $0xf0] sm:$0xff]
    %v57 = vld [vmem:[%s1 + $0xf8] sm:$0xff]
    %v58 = vld [vmem:[%s2] sm:$0x1]
    %v60 = vlaneseq
    %v61 = vshrl.u32 %v60, 7
    %v62 = vsub.s32 0, %v61
    %v63 = vrot.slane %v58, %v62
    %v67 = vunpack.c.l.s4 1983009808
    %v68 = vunpack.c.0.s8 %v67
    %v69 = vlaneseq
    %v70 = vshrl.u32 %v69, 7
    %v71 = vsub.s32 %v68, %v70
    %v72 = vrot.slane %v25, %v71
    %v73 = vcombine.high %v72, %v72
    %76 = vmatprep.subr.mxu0 0.0
    %77 = vmatpush1.msra.mxu0 %v26
    %78 = vmatprep.subr.mxu0 0.0
    %79 = vmatpush1.msra.mxu0 %v27
    %80 = vmatprep.subr.mxu0 0.0
    %81 = vmatpush1.msra.mxu0 %v28
    %82 = vmatprep.subr.mxu0 0.0
    %83 = vmatpush1.msra.mxu0 %v29
    %84 = vmatprep.subr.mxu0 0.0
    %85 = vmatpush1.msra.mxu0 %v30
    %86 = vmatprep.subr.mxu0 0.0
    %87 = vmatpush1.msra.mxu0 %v31
    %88 = vmatprep.subr.mxu0 0.0
    %89 = vmatpush1.msra.mxu0 %v32
    %90 = vmatprep.subr.mxu0 0.0
    %91 = vmatpush1.msra.mxu0 %v33
    %92 = vmatprep.subr.mxu0 0.0
    %93 = vmatpush1.msra.mxu0 %v34
    %94 = vmatprep.subr.mxu0 0.0
    %95 = vmatpush1.msra.mxu0 %v35
    %96 = vmatprep.subr.mxu0 0.0
    %97 = vmatpush1.msra.mxu0 %v36
    %98 = vmatprep.subr.mxu0 0.0
    %99 = vmatpush1.msra.mxu0 %v37
    %100 = vmatprep.subr.mxu0 0.0
    %101 = vmatpush1.msra.mxu0 %v38
    %102 = vmatprep.subr.mxu0 0.0
    %103 = vmatpush1.msra.mxu0 %v39
    %104 = vmatprep.subr.mxu0 0.0
    %105 = vmatpush1.msra.mxu0 %v40
    %106 = vmatprep.subr.mxu0 0.0
    %107 = vmatpush1.msra.mxu0 %v41
    %108 = vmatprep.subr.mxu0 0.0
    %109 = vmatpush1.msra.mxu0 %v42
    %110 = vmatprep.subr.mxu0 0.0
    %111 = vmatpush1.msra.mxu0 %v43
    %112 = vmatprep.subr.mxu0 0.0
    %113 = vmatpush1.msra.mxu0 %v44
    %114 = vmatprep.subr.mxu0 0.0
    %115 = vmatpush1.msra.mxu0 %v45
    %116 = vmatprep.subr.mxu0 0.0
    %117 = vmatpush1.msra.mxu0 %v46
    %118 = vmatprep.subr.mxu0 0.0
    %119 = vmatpush1.msra.mxu0 %v47
    %120 = vmatprep.subr.mxu0 0.0
    %121 = vmatpush1.msra.mxu0 %v48
    %122 = vmatprep.subr.mxu0 0.0
    %123 = vmatpush1.msra.mxu0 %v49
    %124 = vmatprep.subr.mxu0 0.0
    %125 = vmatpush1.msra.mxu0 %v50
    %126 = vmatprep.subr.mxu0 0.0
    %127 = vmatpush1.msra.mxu0 %v51
    %128 = vmatprep.subr.mxu0 0.0
    %129 = vmatpush1.msra.mxu0 %v52
    %130 = vmatprep.subr.mxu0 0.0
    %131 = vmatpush1.msra.mxu0 %v53
    %132 = vmatprep.subr.mxu0 0.0
    %133 = vmatpush1.msra.mxu0 %v54
    %134 = vmatprep.subr.mxu0 0.0
    %135 = vmatpush1.msra.mxu0 %v55
    %136 = vmatprep.subr.mxu0 0.0
    %137 = vmatpush1.msra.mxu0 %v56
    %138 = vmatprep.subr.mxu0 0.0
    %139 = vmatpush1.msra.mxu0 %v57
    %140 = vmatprep.mubr.f32.mxu0 %v73
    %141 = vmatmul.mubr.f32.gmra.mrb[0].mxu0 %v72
    %v142 = vpop.f32.mrb[0].mxu0
    %v143 = vadd.f32 %v63, %v142
    %v144 = vpop.f32.mrb[0].mxu0
    %145 = vdwg.mxu0
    %v146 = vld [vmem:[%s3] sm:$0x3]
    %v147 = vld [vmem:[%s4] sm:$0x3]
    %149 = vset.pattern.permute.xlu0 0
    %150 = vperm.xlu0 %149, %v147
    %v151 = vpop.permute.xlu0 %150
    %vm153 = vcmask 261120
    %v155 = vsel %vm153, %v146, 0
    %v158 = vsel %vm153, %v143, 0
    %160 = vmatprep.subr.mxu0 0.0
    %161 = vmatpush1.xpose.msra.mxu0 %v158
    %162 = vmatprep.subr.mxu0 0.0
    %163 = vmatpush1.xpose.msra.mxu0 0.0
    %164 = vmatprep.subr.mxu0 0.0
    %165 = vmatpush1.xpose.msra.mxu0 0.0
    %166 = vmatprep.subr.mxu0 0.0
    %167 = vmatpush1.xpose.msra.mxu0 0.0
    %168 = vmatprep.subr.mxu0 0.0
    %169 = vmatpush1.xpose.msra.mxu0 0.0
    %170 = vmatprep.subr.mxu0 0.0
    %171 = vmatpush1.xpose.msra.mxu0 0.0
    %172 = vmatprep.subr.mxu0 0.0
    %173 = vmatpush1.xpose.msra.mxu0 0.0
    %174 = vmatprep.subr.mxu0 0.0
    %175 = vmatpush1.xpose.msra.mxu0 0.0
    %176 = vmatprep.subr.mxu0 0.0
    %177 = vmatpush1.xpose.msra.mxu0 0.0
    %178 = vmatprep.subr.mxu0 0.0
    %179 = vmatpush1.xpose.msra.mxu0 0.0
    %180 = vmatprep.subr.mxu0 0.0
    %181 = vmatpush1.xpose.msra.mxu0 0.0
    %182 = vmatprep.subr.mxu0 0.0
    %183 = vmatpush1.xpose.msra.mxu0 0.0
    %184 = vmatprep.subr.mxu0 0.0
    %185 = vmatpush1.xpose.msra.mxu0 0.0
    %186 = vmatprep.subr.mxu0 0.0
    %187 = vmatpush1.xpose.msra.mxu0 0.0
    %188 = vmatprep.subr.mxu0 0.0
    %189 = vmatpush1.xpose.msra.mxu0 0.0
    %190 = vmatprep.subr.mxu0 0.0
    %191 = vmatpush1.xpose.msra.mxu0 0.0
    %192 = vmatprep.subr.mxu0 0.0
    %193 = vmatpush1.xpose.msra.mxu0 0.0
    %194 = vmatprep.subr.mxu0 0.0
    %195 = vmatpush1.xpose.msra.mxu0 0.0
    %196 = vmatprep.subr.mxu0 0.0
    %197 = vmatpush1.xpose.msra.mxu0 0.0
    %198 = vmatprep.subr.mxu0 0.0
    %199 = vmatpush1.xpose.msra.mxu0 0.0
    %200 = vmatprep.subr.mxu0 0.0
    %201 = vmatpush1.xpose.msra.mxu0 0.0
    %202 = vmatprep.subr.mxu0 0.0
    %203 = vmatpush1.xpose.msra.mxu0 0.0
    %204 = vmatprep.subr.mxu0 0.0
    %205 = vmatpush1.xpose.msra.mxu0 0.0
    %206 = vmatprep.subr.mxu0 0.0
    %207 = vmatpush1.xpose.msra.mxu0 0.0
    %208 = vmatprep.subr.mxu0 0.0
    %209 = vmatpush1.xpose.msra.mxu0 0.0
    %210 = vmatprep.subr.mxu0 0.0
    %211 = vmatpush1.xpose.msra.mxu0 0.0
    %212 = vmatprep.subr.mxu0 0.0
    %213 = vmatpush1.xpose.msra.mxu0 0.0
    %214 = vmatprep.subr.mxu0 0.0
    %215 = vmatpush1.xpose.msra.mxu0 0.0
    %216 = vmatprep.subr.mxu0 0.0
    %217 = vmatpush1.xpose.msra.mxu0 0.0
    %218 = vmatprep.subr.mxu0 0.0
    %219 = vmatpush1.xpose.msra.mxu0 0.0
    %220 = vmatprep.subr.mxu0 0.0
    %221 = vmatpush1.xpose.msra.mxu0 0.0
    %222 = vmatprep.subr.mxu0 0.0
    %223 = vmatpush1.xpose.msra.mxu0 0.0
    %224 = vmatprep.mubr.f32.mxu0 0.0
    %225 = vmatmul.mubr.f32.gmra.mrb[0].mxu0 %v155
    %v226 = vpop.f32.mrb[0].mxu0
    %v227 = vadd.f32 %v151, %v226
    %v228 = vpop.f32.mrb[0].mxu0
    %229 = vdwg.mxu0
    %vm230 = vcmask 9216
    %231 = vst.msk [vmem:[#allocation2] sm:$0x3] %vm230, %v227
    // Predicated region
    $region22: #{tpu_custom_call.1} parent=1 // pred_check
      _
    $region23: #{tpu_custom_call.1} parent=1 // pred_check_branch
      %233 = sbr.rel (0) target = $region25
    $region24: #{tpu_custom_call.1} parent=1 // pred_region
      %s235 = ssub.s32 32, 32
      %236 = vsyncadd [#allocation3], %s235
      %s238 = sshll.u32 [#allocation2], 4
      %s239 = int_to_ptr.vmem [resolvable:$true] %s238
      %241 = dma.vmem_to_hbm [thread:$0]  %s239, 32, %s5, [#allocation3]
    $region25: #{tpu_custom_call.1} parent=1 // pred_fallthru
      _
    // Predicated region
    $region26: #{tpu_custom_call.1} parent=1 // pred_check
      _
    $region27: #{tpu_custom_call.1} parent=1 // pred_check_branch
      %243 = sbr.rel (0) target = $region29
    $region28: #{tpu_custom_call.1} parent=1 // pred_region
      %244 = dma.done [#allocation3], 32
    $region29: #{tpu_custom_call.1} parent=1 // pred_fallthru
      _
    %245 = vsyncpa [#allocation3], 1

</llo_original>
